<compile_context>
chip_gen: v7x
topology: tpu7x:2x2x1
jax: 0.10.0
libtpu: 0.0.40
codegen_flags: <defaults>
</compile_context>

<pallas_src>
import functools

import jax
import jax.numpy as jnp
from jax.experimental import pallas as pl
from jax.experimental.pallas import tpu as pltpu


def _round_up(x: int, m: int) -> int:
    return (x + m - 1) // m * m


# ----------------------------------------------------------------------------
# Kernel A (small vocab): fused gather + concat + (Linear, ReLU, Linear) x 2.
# ----------------------------------------------------------------------------
def _userhist_onehot_kernel(idx_ref, g1_ref, b1_ref, w2_ref, b2_ref, out_ref,
                            *, bounds):
    tb = idx_ref.shape[0]          # batch tile
    v = g1_ref.shape[0]            # fused (padded) vocab width

    idx = idx_ref[...]                                            # (tb, 5) i32
    lane = jax.lax.broadcasted_iota(jnp.int32, (tb, v), 1)

    # Select, per vocab lane, which (pre-offset) index column owns that block,
    # then do ONE compare and ONE cast chain.  Correct only because the 5
    # index columns are offset into disjoint vocab blocks and g1 is zero
    # outside each block's hidden half (see build_fused_params).
    sel = idx[:, 4:5]                                 # a_gen block (lane >= bounds[3])
    sel = jnp.where(lane < bounds[3], idx[:, 3:4], sel)   # a_user block
    sel = jnp.where(lane < bounds[2], idx[:, 2:3], sel)   # category block
    sel = jnp.where(lane < bounds[1], idx[:, 1:2], sel)   # q_gen block
    sel = jnp.where(lane < bounds[0], idx[:, 0:1], sel)   # q_user block
    # f32 compare result, single bf16 cast right before the MXU push
    # (v5e-safe; one extra pass vs direct bf16 build on v6e/v7x).
    onehot = (lane == sel).astype(jnp.float32).astype(jnp.bfloat16)

    # Layer 1: one-hot @ (embedding @ W1-block)  ==  gather + concat + Linear.
    h = jnp.dot(onehot, g1_ref[...], preferred_element_type=jnp.float32)
    h = jnp.maximum(h + b1_ref[...], 0.0)     # f32 epilogue, full 128-lane vregs

    # Layer 2: block-diagonal [W2q, W2a], zero-padded to a 128-lane output.
    y = jnp.dot(h.astype(jnp.bfloat16), w2_ref[...],
                preferred_element_type=jnp.float32)
    out_ref[...] = (y + b2_ref[...]).astype(out_ref.dtype)


def _fused_onehot_mlp(idx, g1, b1, w2, b2, *, bounds, out_dtype=jnp.float32):
    b, n_idx = idx.shape
    v_pad, h_pad = g1.shape
    out_pad = w2.shape[1]

    # Batch tiling: large tiles amortize the ~0.35us/grid-step overhead, but
    # keep the in-kernel (tb, V) one-hot temporaries (f32 + bf16 copies)
    # under ~8 MiB; batches that fit in <= 2 max tiles are split across >= 2
    # grid steps so both v7x TensorCores get work.
    vmem_budget = 8 * 1024 * 1024
    tile_cap = max(8, min(2048, (vmem_budget // (v_pad * 6)) // 8 * 8))
    if b > 2 * tile_cap:
        tb = tile_cap
    else:
        tb = min(tile_cap, max(8, _round_up(pl.cdiv(b, 2), 8)))
    b_pad = _round_up(b, tb)
    if b_pad != b:
        # Padded rows carry idx==0 (hits lane 0 only); their garbage outputs
        # are sliced off below (out[:b]) — do not reuse padded rows.
        idx = jnp.pad(idx, ((0, b_pad - b), (0, 0)))
    grid = (b_pad // tb,)

    flops = 2 * b_pad * (v_pad * h_pad + h_pad * out_pad)
    bytes_accessed = (b_pad * n_idx * 4 + g1.size * 2 + b1.size * 4
                      + w2.size * 2 + b2.size * 4
                      + b_pad * out_pad * jnp.dtype(out_dtype).itemsize)

    kernel = functools.partial(_userhist_onehot_kernel, bounds=bounds)
    out = pl.pallas_call(
        kernel,
        grid=grid,
        in_specs=[
            pl.BlockSpec((tb, n_idx), lambda i: (i, 0)),     # indices: tiled
            pl.BlockSpec((v_pad, h_pad), lambda i: (0, 0)),  # weights: resident
            pl.BlockSpec((1, h_pad), lambda i: (0, 0)),
            pl.BlockSpec((h_pad, out_pad), lambda i: (0, 0)),
            pl.BlockSpec((1, out_pad), lambda i: (0, 0)),
        ],
        out_specs=pl.BlockSpec((tb, out_pad), lambda i: (i, 0)),
        out_shape=jax.ShapeDtypeStruct((b_pad, out_pad), out_dtype),
        compiler_params=pltpu.CompilerParams(
            dimension_semantics=("parallel",),
            vmem_limit_bytes=32 * 1024 * 1024),
        cost_estimate=pl.CostEstimate(
            flops=flops, transcendentals=0, bytes_accessed=bytes_accessed),
    )(idx, g1, b1, w2, b2)
    return out[:b]


# ----------------------------------------------------------------------------
# Kernel B (large vocab): dense gathered features -> fused two-layer MLP.
# ----------------------------------------------------------------------------
def _dense_mlp_kernel(x_ref, w1_ref, b1_ref, w2_ref, b2_ref, out_ref):
    h = jnp.dot(x_ref[...], w1_ref[...], preferred_element_type=jnp.float32)
    h = jnp.maximum(h + b1_ref[...], 0.0)
    y = jnp.dot(h.astype(jnp.bfloat16), w2_ref[...],
                preferred_element_type=jnp.float32)
    out_ref[...] = (y + b2_ref[...]).astype(out_ref.dtype)


def _fused_dense_mlp(x, w1, b1, w2, b2, *, out_dtype=jnp.float32):
    b, feat_pad = x.shape
    h_pad = w1.shape[1]
    out_pad = w2.shape[1]

    tile_cap = 2048
    if b > 2 * tile_cap:
        tb = tile_cap
    else:
        tb = max(8, _round_up(pl.cdiv(b, 2), 8))
    b_pad = _round_up(b, tb)
    if b_pad != b:
        x = jnp.pad(x, ((0, b_pad - b), (0, 0)))
    grid = (b_pad // tb,)

    flops = 2 * b_pad * (feat_pad * h_pad + h_pad * out_pad)
    bytes_accessed = (b_pad * feat_pad * 2 + w1.size * 2 + b1.size * 4
                      + w2.size * 2 + b2.size * 4
                      + b_pad * out_pad * jnp.dtype(out_dtype).itemsize)

    out = pl.pallas_call(
        _dense_mlp_kernel,
        grid=grid,
        in_specs=[
            pl.BlockSpec((tb, feat_pad), lambda i: (i, 0)),
            pl.BlockSpec((feat_pad, h_pad), lambda i: (0, 0)),
            pl.BlockSpec((1, h_pad), lambda i: (0, 0)),
            pl.BlockSpec((h_pad, out_pad), lambda i: (0, 0)),
            pl.BlockSpec((1, out_pad), lambda i: (0, 0)),
        ],
        out_specs=pl.BlockSpec((tb, out_pad), lambda i: (i, 0)),
        out_shape=jax.ShapeDtypeStruct((b_pad, out_pad), out_dtype),
        compiler_params=pltpu.CompilerParams(
            dimension_semantics=("parallel",),
            vmem_limit_bytes=32 * 1024 * 1024),
        cost_estimate=pl.CostEstimate(
            flops=flops, transcendentals=0, bytes_accessed=bytes_accessed),
    )(x, w1, b1, w2, b2)
    return out[:b]


# ----------------------------------------------------------------------------
# One-time fused-weight construction (hoisted out of the forward hot path).
# ----------------------------------------------------------------------------
def build_fused_params(params, *, dense_threshold=4096, out_dtype=jnp.float32):
    eu, eg, ec = params["emb_user"], params["emb_gen"], params["emb_cat"]
    nu, du = eu.shape
    ng, dg = eg.shape
    nc, dc = ec.shape
    w1q, w1a = params["w1q"], params["w1a"]
    w2q, w2a = params["w2q"], params["w2a"]
    h = w1q.shape[1]
    h_pad = max(128, _round_up(2 * h, 128))     # fused + lane-padded hidden
    out_pad = max(128, _round_up(2 * h, 128))   # lane-dense output slab

    # Shared second layer / biases (zero-padded to 128-lane widths).
    b1 = jnp.pad(jnp.concatenate([params["b1q"], params["b1a"]], axis=1),
                 ((0, 0), (0, h_pad - 2 * h)))                    # (1, h_pad)
    zh = jnp.zeros((h, h), jnp.float32)
    w2 = jnp.concatenate([
        jnp.concatenate([w2q, zh], axis=1),
        jnp.concatenate([zh, w2a], axis=1),
    ], axis=0)                                                    # (2h, 2h)
    w2 = jnp.pad(w2, ((0, h_pad - 2 * h), (0, out_pad - 2 * h)))  # (h_pad, out_pad)
    b2 = jnp.pad(jnp.concatenate([params["b2q"], params["b2a"]], axis=1),
                 ((0, 0), (0, out_pad - 2 * h)))                  # (1, out_pad)

    v = 2 * nu + 2 * ng + nc
    if v <= dense_threshold:
        # Small-vocab path: per-table (embedding @ W1-slice) blocks laid out
        # along a fused vocab axis [q_user | q_gen | category | a_user | a_gen].
        g_qu = eu @ w1q[:du]                  # -> hidden[:h]
        g_qg = eg @ w1q[du:du + dg]           # -> hidden[:h]
        g_qc = ec @ w1q[du + dg:]             # -> hidden[:h]
        g_au = eu @ w1a[:du]                  # -> hidden[h:2h]
        g_ag = eg @ w1a[du:]                  # -> hidden[h:2h]
        zq = lambda m: jnp.zeros((m.shape[0], h), jnp.float32)
        g1 = jnp.concatenate([
            jnp.concatenate([g_qu, zq(g_qu)], axis=1),
            jnp.concatenate([g_qg, zq(g_qg)], axis=1),
            jnp.concatenate([g_qc, zq(g_qc)], axis=1),
            jnp.concatenate([zq(g_au), g_au], axis=1),
            jnp.concatenate([zq(g_ag), g_ag], axis=1),
        ], axis=0)                                                # (V, 2h)
        v_pad = _round_up(v, 128)             # full-lane one-hot vregs
        g1 = jnp.pad(g1, ((0, v_pad - v), (0, h_pad - 2 * h)))    # (v_pad, h_pad)

        # NOTE: the in-kernel select/compare one-hot trick relies on these
        # offsets being disjoint, monotonically increasing blocks matching the
        # g1 row layout above.  Changing either silently breaks correctness.
        offsets = (0, nu, nu + ng, nu + ng + nc, nu + ng + nc + nu)
        bounds = offsets[1:] + (v,)
        assert all(bounds[i] < bounds[i + 1] for i in range(len(bounds) - 1))

        arrays = dict(g1=g1.astype(jnp.bfloat16), b1=b1,
                      w2=w2.astype(jnp.bfloat16), b2=b2)
        config = dict(mode="onehot", offsets=offsets, bounds=offsets[1:],
                      h=h, out_dtype=out_dtype)
    else:
        # Large-vocab escape hatch: XLA gathers embeddings, kernel consumes
        # dense feature rows against a block-diagonal W1.
        feat = 2 * du + 2 * dg + dc
        feat_pad = max(128, _round_up(feat, 128))
        w1 = jnp.zeros((feat_pad, h_pad), jnp.float32)
        w1 = w1.at[:du + dg + dc, :h].set(w1q)
        w1 = w1.at[du + dg + dc:feat, h:2 * h].set(w1a)
        arrays = dict(emb_user=eu.astype(jnp.bfloat16),
                      emb_gen=eg.astype(jnp.bfloat16),
                      emb_cat=ec.astype(jnp.bfloat16),
                      w1=w1.astype(jnp.bfloat16), b1=b1,
                      w2=w2.astype(jnp.bfloat16), b2=b2)
        config = dict(mode="dense", h=h, feat=feat, feat_pad=feat_pad,
                      out_dtype=out_dtype)
    return arrays, config


# ----------------------------------------------------------------------------
# Forward-pass factory (weights passed as device arrays, config static).
# ----------------------------------------------------------------------------
def make_userhist_forward(arrays, config):
    h = config["h"]
    out_dtype = config["out_dtype"]

    if config["mode"] == "onehot":
        offsets = jnp.asarray(config["offsets"], dtype=jnp.int32)
        bounds = config["bounds"]

        @jax.jit
        def fwd(arrs, category, num_q, question_user, num_qu, cat_au, num_au):
            # TODO(synk): UserhistEncoder (self.ans_encoder) source was not
            # provided; the answer branch substitutes the module's own
            # ffanswer1/ffanswer2 MLP on (answer user, generation) embeddings,
            # so num_q/num_qu/num_au and the answer-to-user history
            # (cat_au[:, 2:]) are left unconsumed.
            del num_q, num_qu, num_au
            idx = jnp.stack([question_user[:, 0], question_user[:, 1],
                             category[:, 0], cat_au[:, 0], cat_au[:, 1]],
                            axis=1).astype(jnp.int32)
            idx = idx + offsets[None, :]          # offset into disjoint blocks
            out = _fused_onehot_mlp(idx, arrs["g1"], arrs["b1"], arrs["w2"],
                                    arrs["b2"], bounds=bounds,
                                    out_dtype=out_dtype)
            return out[:, :h], out[:, h:2 * h]

        return lambda *inputs: fwd(arrays, *inputs)

    feat, feat_pad = config["feat"], config["feat_pad"]

    @jax.jit
    def fwd(arrs, category, num_q, question_user, num_qu, cat_au, num_au):
        # TODO(synk): see note above re: ans_encoder / numerical features.
        del num_q, num_qu, num_au
        quser = arrs["emb_user"][question_user[:, 0]]
        qgen = arrs["emb_gen"][question_user[:, 1]]
        cvec = arrs["emb_cat"][category[:, 0]]
        auser = arrs["emb_user"][cat_au[:, 0]]
        agen = arrs["emb_gen"][cat_au[:, 1]]
        x = jnp.concatenate([quser, qgen, cvec, auser, agen], axis=1)
        x = jnp.pad(x, ((0, 0), (0, feat_pad - feat)))
        out = _fused_dense_mlp(x, arrs["w1"], arrs["b1"], arrs["w2"],
                               arrs["b2"], out_dtype=out_dtype)
        return out[:, :h], out[:, h:2 * h]

    return lambda *inputs: fwd(arrays, *inputs)


# ----------------------------------------------------------------------------
# Parameter construction (deterministic, synthetic).  Weights stored (in, out).
# ----------------------------------------------------------------------------
def init_params(key, num_user, num_category, num_gen,
                dim_user, dim_category, dim_gen, dim_out):
    ks = jax.random.split(key, 11)
    dim_q_in = dim_user + dim_gen + dim_category
    dim_a_in = dim_user + dim_gen
    n = lambda k, s: (0.05 * jax.random.normal(k, s)).astype(jnp.float32)
    return {
        "emb_user": n(ks[0], (num_user, dim_user)),
        "emb_gen":  n(ks[1], (num_gen, dim_gen)),
        "emb_cat":  n(ks[2], (num_category, dim_category)),
        "w1q": n(ks[3], (dim_q_in, dim_out)), "b1q": n(ks[4], (1, dim_out)),
        "w2q": n(ks[5], (dim_out, dim_out)),  "b2q": n(ks[6], (1, dim_out)),
        "w1a": n(ks[7], (dim_a_in, dim_out)), "b1a": n(ks[8], (1, dim_out)),
        "w2a": n(ks[9], (dim_out, dim_out)),  "b2a": n(ks[10], (1, dim_out)),
    }


# Pure-JAX f32 reference (correctness check for both kernel paths).
def _reference_forward(params, category, question_user, cat_au):
    quser = params["emb_user"][question_user[:, 0]]
    qgen = params["emb_gen"][question_user[:, 1]]
    cvec = params["emb_cat"][category[:, 0]]
    auser = params["emb_user"][cat_au[:, 0]]
    agen = params["emb_gen"][cat_au[:, 1]]
    qf = jnp.concatenate([quser, qgen, cvec], axis=1)
    af = jnp.concatenate([auser, agen], axis=1)
    hq = jnp.maximum(qf @ params["w1q"] + params["b1q"], 0.0)
    q_out = hq @ params["w2q"] + params["b2q"]
    ha = jnp.maximum(af @ params["w1a"] + params["b1a"], 0.0)
    a_out = ha @ params["w2a"] + params["b2a"]
    return q_out, a_out


# ----------------------------------------------------------------------------
# Demo / smoke test.
# ----------------------------------------------------------------------------
if __name__ == "__main__":
    num_user, num_category, num_gen = 50, 10, 5
    dim_user, dim_category, dim_gen, dim_out = 16, 8, 8, 32
    num_numerical = 3
    B, S = 8, 6  # batch, answer-to-user history length

    key = jax.random.PRNGKey(0)
    kp, k1, k2, k3, k4, k5 = jax.random.split(key, 6)

    params = init_params(kp, num_user, num_category, num_gen,
                         dim_user, dim_category, dim_gen, dim_out)

    category = jax.random.randint(k1, (B, 1), 0, num_category, dtype=jnp.int32)
    num_q = jax.random.normal(k2, (B, num_numerical), dtype=jnp.float32)
    q_uid = jax.random.randint(k3, (B, 1), 0, num_user, dtype=jnp.int32)
    q_gen = jax.random.randint(k3, (B, 1), 0, num_gen, dtype=jnp.int32)
    question_user = jnp.concatenate([q_uid, q_gen], axis=1)
    num_qu = jax.random.normal(k4, (B, num_numerical), dtype=jnp.float32)
    a_uid = jax.random.randint(k5, (B, 1), 0, num_user, dtype=jnp.int32)
    a_gen = jax.random.randint(k5, (B, 1), 0, num_gen, dtype=jnp.int32)
    a_hist = jax.random.randint(k5, (B, S), 0, num_user, dtype=jnp.int32)
    cat_au = jnp.concatenate([a_uid, a_gen, a_hist], axis=1)
    num_au = jax.random.normal(k1, (B, num_numerical), dtype=jnp.float32)

    q_ref, a_ref = _reference_forward(params, category, question_user, cat_au)

    # Path 1: small-vocab one-hot kernel (weight fusion done once, reused).
    arrays, config = build_fused_params(params)
    forward = make_userhist_forward(arrays, config)
    q_out, a_out = forward(category, num_q, question_user, num_qu,
                           cat_au, num_au)
    jax.block_until_ready((q_out, a_out))
    assert q_out.shape == (B, dim_out) and a_out.shape == (B, dim_out)
    assert q_out.dtype == jnp.float32 and a_out.dtype == jnp.float32
    assert jnp.allclose(q_out, q_ref, rtol=5e-2, atol=1e-2)
    assert jnp.allclose(a_out, a_ref, rtol=5e-2, atol=1e-2)

    # Path 2: large-vocab dense-gather escape hatch (forced here for coverage).
    arrays_d, config_d = build_fused_params(params, dense_threshold=0)
    forward_d = make_userhist_forward(arrays_d, config_d)
    q_d, a_d = forward_d(category, num_q, question_user, num_qu,
                         cat_au, num_au)
    jax.block_until_ready((q_d, a_d))
    assert q_d.shape == (B, dim_out) and a_d.shape == (B, dim_out)
    assert jnp.allclose(q_d, q_ref, rtol=5e-2, atol=1e-2)
    assert jnp.allclose(a_d, a_ref, rtol=5e-2, atol=1e-2)

    print("KERNEL_OK")
</pallas_src>

<mosaic_0001>
module attributes {stable_mosaic.version = 11 : i64} {
  func.func @_userhist_onehot_kernel(%arg0: i32, %arg1: memref<8x5xi32, #tpu.memory_space<vmem>>, %arg2: memref<128x128xbf16, #tpu.memory_space<vmem>>, %arg3: memref<1x128xf32, #tpu.memory_space<vmem>>, %arg4: memref<128x128xbf16, #tpu.memory_space<vmem>>, %arg5: memref<1x128xf32, #tpu.memory_space<vmem>>, %arg6: memref<8x128xf32, #tpu.memory_space<vmem>>) attributes {dimension_semantics = [#tpu.dimension_semantics<parallel>], iteration_bounds = array<i64: 1>, scalar_prefetch = 0 : i64, scratch_operands = 0 : i64, tpu.core_type = #tpu.core_type<tc>, window_params = [{transform_indices = @transform_0, window_bounds = array<i64: 8, 5>}, {pipeline_mode = #tpu.pipeline_mode<synchronous>, transform_indices = @transform_1, window_bounds = array<i64: 128, 128>}, {pipeline_mode = #tpu.pipeline_mode<synchronous>, transform_indices = @transform_2, window_bounds = array<i64: 1, 128>}, {pipeline_mode = #tpu.pipeline_mode<synchronous>, transform_indices = @transform_3, window_bounds = array<i64: 128, 128>}, {pipeline_mode = #tpu.pipeline_mode<synchronous>, transform_indices = @transform_4, window_bounds = array<i64: 1, 128>}, {transform_indices = @transform_5, window_bounds = array<i64: 8, 128>}]} {
    %c0 = arith.constant 0 : index
    %c0_0 = arith.constant 0 : index
    %0 = vector.load %arg1[%c0, %c0_0] : memref<8x5xi32, #tpu.memory_space<vmem>>, vector<8x5xi32>
    %1 = tpu.iota {dimensions = array<i32: 1>} : vector<8x128xi32>
    %2 = vector.extract_strided_slice %0 {offsets = [0, 4], sizes = [8, 1], strides = [1, 1]} : vector<8x5xi32> to vector<8x1xi32>
    %c115_i32 = arith.constant 115 : i32
    %3 = vector.broadcast %c115_i32 : i32 to vector<8x128xi32>
    %4 = arith.cmpi slt, %1, %3 : vector<8x128xi32>
    %5 = vector.extract_strided_slice %0 {offsets = [0, 3], sizes = [8, 1], strides = [1, 1]} : vector<8x5xi32> to vector<8x1xi32>
    %6 = vector.shape_cast %5 : vector<8x1xi32> to vector<8x1xi32>
    %7 = vector.broadcast %6 : vector<8x1xi32> to vector<8x128xi32>
    %8 = vector.shape_cast %2 : vector<8x1xi32> to vector<8x1xi32>
    %9 = vector.broadcast %8 : vector<8x1xi32> to vector<8x128xi32>
    %10 = arith.select %4, %7, %9 : vector<8x128xi1>, vector<8x128xi32>
    %c65_i32 = arith.constant 65 : i32
    %11 = vector.broadcast %c65_i32 : i32 to vector<8x128xi32>
    %12 = arith.cmpi slt, %1, %11 : vector<8x128xi32>
    %13 = vector.extract_strided_slice %0 {offsets = [0, 2], sizes = [8, 1], strides = [1, 1]} : vector<8x5xi32> to vector<8x1xi32>
    %14 = vector.shape_cast %13 : vector<8x1xi32> to vector<8x1xi32>
    %15 = vector.broadcast %14 : vector<8x1xi32> to vector<8x128xi32>
    %16 = arith.select %12, %15, %10 : vector<8x128xi1>, vector<8x128xi32>
    %c55_i32 = arith.constant 55 : i32
    %17 = vector.broadcast %c55_i32 : i32 to vector<8x128xi32>
    %18 = arith.cmpi slt, %1, %17 : vector<8x128xi32>
    %19 = vector.extract_strided_slice %0 {offsets = [0, 1], sizes = [8, 1], strides = [1, 1]} : vector<8x5xi32> to vector<8x1xi32>
    %20 = vector.shape_cast %19 : vector<8x1xi32> to vector<8x1xi32>
    %21 = vector.broadcast %20 : vector<8x1xi32> to vector<8x128xi32>
    %22 = arith.select %18, %21, %16 : vector<8x128xi1>, vector<8x128xi32>
    %c50_i32 = arith.constant 50 : i32
    %23 = vector.broadcast %c50_i32 : i32 to vector<8x128xi32>
    %24 = arith.cmpi slt, %1, %23 : vector<8x128xi32>
    %25 = vector.extract_strided_slice %0 {offsets = [0, 0], sizes = [8, 1], strides = [1, 1]} : vector<8x5xi32> to vector<8x1xi32>
    %26 = vector.shape_cast %25 : vector<8x1xi32> to vector<8x1xi32>
    %27 = vector.broadcast %26 : vector<8x1xi32> to vector<8x128xi32>
    %28 = arith.select %24, %27, %22 : vector<8x128xi1>, vector<8x128xi32>
    %29 = arith.cmpi eq, %1, %28 : vector<8x128xi32>
    %30 = arith.extui %29 : vector<8x128xi1> to vector<8x128xi32>
    %31 = arith.sitofp %30 : vector<8x128xi32> to vector<8x128xf32>
    %32 = arith.truncf %31 : vector<8x128xf32> to vector<8x128xbf16>
    %c0_1 = arith.constant 0 : index
    %c0_2 = arith.constant 0 : index
    %33 = vector.load %arg2[%c0_1, %c0_2] : memref<128x128xbf16, #tpu.memory_space<vmem>>, vector<128x128xbf16>
    %cst = arith.constant dense<0.000000e+00> : vector<8x128xf32>
    %34 = tpu.matmul %32, %33, %cst {dimension_numbers = #tpu.dot_dimension_numbers<[1], [0], [0], [1], [0, 0, 1, 1], [], []>} : vector<8x128xbf16>, vector<128x128xbf16>, vector<8x128xf32> -> vector<8x128xf32>
    %c0_3 = arith.constant 0 : index
    %c0_4 = arith.constant 0 : index
    %35 = vector.load %arg3[%c0_3, %c0_4] : memref<1x128xf32, #tpu.memory_space<vmem>>, vector<1x128xf32>
    %36 = vector.broadcast %35 : vector<1x128xf32> to vector<8x128xf32>
    %37 = arith.addf %34, %36 : vector<8x128xf32>
    %cst_5 = arith.constant 0.000000e+00 : f32
    %38 = vector.broadcast %cst_5 : f32 to vector<8x128xf32>
    %39 = arith.maximumf %37, %38 : vector<8x128xf32>
    %40 = arith.truncf %39 : vector<8x128xf32> to vector<8x128xbf16>
    %c0_6 = arith.constant 0 : index
    %c0_7 = arith.constant 0 : index
    %41 = vector.load %arg4[%c0_6, %c0_7] : memref<128x128xbf16, #tpu.memory_space<vmem>>, vector<128x128xbf16>
    %cst_8 = arith.constant dense<0.000000e+00> : vector<8x128xf32>
    %42 = tpu.matmul %40, %41, %cst_8 {dimension_numbers = #tpu.dot_dimension_numbers<[1], [0], [0], [1], [0, 0, 1, 1], [], []>} : vector<8x128xbf16>, vector<128x128xbf16>, vector<8x128xf32> -> vector<8x128xf32>
    %c0_9 = arith.constant 0 : index
    %c0_10 = arith.constant 0 : index
    %43 = vector.load %arg5[%c0_9, %c0_10] : memref<1x128xf32, #tpu.memory_space<vmem>>, vector<1x128xf32>
    %44 = vector.broadcast %43 : vector<1x128xf32> to vector<8x128xf32>
    %45 = arith.addf %42, %44 : vector<8x128xf32>
    %c0_11 = arith.constant 0 : index
    %c0_12 = arith.constant 0 : index
    %46 = vector.load %arg6[%c0_11, %c0_12] : memref<8x128xf32, #tpu.memory_space<vmem>>, vector<8x128xf32>
    tpu.vector_store %arg6[%c0_11, %c0_12], %45 {strides = array<i32>} : memref<8x128xf32, #tpu.memory_space<vmem>>, vector<8x128xf32>,
    return
  }
  func.func @transform_0(%arg0: i32) -> (i32, i32) {
    %c0_i32 = arith.constant 0 : i32
    %c0_i32_0 = arith.constant 0 : i32
    return %arg0, %c0_i32 : i32, i32
  }
  func.func @transform_1(%arg0: i32) -> (i32, i32) {
    %c0_i32 = arith.constant 0 : i32
    %c0_i32_0 = arith.constant 0 : i32
    %c0_i32_1 = arith.constant 0 : i32
    return %c0_i32, %c0_i32_0 : i32, i32
  }
  func.func @transform_2(%arg0: i32) -> (i32, i32) {
    %c0_i32 = arith.constant 0 : i32
    %c0_i32_0 = arith.constant 0 : i32
    %c0_i32_1 = arith.constant 0 : i32
    return %c0_i32, %c0_i32_0 : i32, i32
  }
  func.func @transform_3(%arg0: i32) -> (i32, i32) {
    %c0_i32 = arith.constant 0 : i32
    %c0_i32_0 = arith.constant 0 : i32
    %c0_i32_1 = arith.constant 0 : i32
    return %c0_i32, %c0_i32_0 : i32, i32
  }
  func.func @transform_4(%arg0: i32) -> (i32, i32) {
    %c0_i32 = arith.constant 0 : i32
    %c0_i32_0 = arith.constant 0 : i32
    %c0_i32_1 = arith.constant 0 : i32
    return %c0_i32, %c0_i32_0 : i32, i32
  }
  func.func @transform_5(%arg0: i32) -> (i32, i32) {
    %c0_i32 = arith.constant 0 : i32
    %c0_i32_0 = arith.constant 0 : i32
    return %arg0, %c0_i32 : i32, i32
  }
}

</mosaic_0001>

<llo_original>
// kernel: fwd.1
$region0: #{fwd.1}
  #allocation0 [shape = 'u32[]', space=smem, size = 0x4, offset = 0x4, fixed_abs, tag = 'smem constant byte address 0x4 - core index']
  #allocation1 [shape = 'u32[144,128]{1,0:T(1,128)}', space=vmem, size = 0x12000, scoped, tag = 'internal scratch']
  %s0 = inlined_call_operand.vmem [shape: s32[8,5], index: 0, kind: input, shape index: {}]
  %s1 = inlined_call_operand.hbm [shape: bf16[128,128], index: 1, kind: input, shape index: {}]
  %s2 = inlined_call_operand.hbm [shape: f32[1,128], index: 2, kind: input, shape index: {}]
  %s3 = inlined_call_operand.vmem [shape: bf16[128,128], index: 3, kind: input, shape index: {}]
  %s4 = inlined_call_operand.hbm [shape: f32[1,128], index: 4, kind: input, shape index: {}]
  %s5 = inlined_call_operand.vmem [shape: f32[8,128], index: 5, kind: output, shape index: {}]
  %s6 = sld [smem:[#allocation0]]
  $region42: #{fwd.1} parent=0
    _
  %s8 = ssub.s32 1, %s6
  %s9 = scalar_select 0, %s8, %s6
  $region1: #{fwd.1} parent=0
    #allocation2 [shape = 'u8[32768]{0}', space=vmem, size = 0x8000, scoped, tag = 'input window, operand 1, single buffered']
    #allocation3 [shape = 's32[1]{0}', space=sflag, size = 0x4, scoped, tag = 'scoped memory for fwd.1']
    #allocation4 [shape = 'u8[512]{0}', space=vmem, size = 0x400, scoped, tag = 'input window, operand 2, single buffered']
    #allocation5 [shape = 's32[1]{0}', space=sflag, size = 0x4, scoped, tag = 'scoped memory for fwd.1']
    #allocation6 [shape = 'u8[512]{0}', space=vmem, size = 0x400, scoped, tag = 'input window, operand 4, single buffered']
    %10 = vsyncpa [#allocation3], 0
    %11 = vsyncpa [#allocation5], 0
    // Predicated region
    $region2: #{fwd.1} parent=1 // pred_check
      _
    $region3: #{fwd.1} parent=1 // pred_check_branch
      %13 = sbr.rel (0) target = $region5
    $region4: #{fwd.1} parent=1 // pred_region
      _
    $region5: #{fwd.1} parent=1 // pred_fallthru
      _
    // Predicated region
    $region6: #{fwd.1} parent=1 // pred_check
      _
    $region7: #{fwd.1} parent=1 // pred_check_branch
      %15 = sbr.rel (0) target = $region9
    $region8: #{fwd.1} parent=1 // pred_region
      %s17 = ssub.s32 1024, 1024
      %18 = vsyncadd [#allocation3], %s17
      %s19 = sshll.u32 [#allocation2], 4
      %s20 = int_to_ptr.vmem [resolvable:$true] %s19
      %25 = dma.hbm_to_vmem [thread:$0]  %s1, 1024, %s20, [#allocation3], 64, 64, 4
    $region9: #{fwd.1} parent=1 // pred_fallthru
      _
    // Predicated region
    $region10: #{fwd.1} parent=1 // pred_check
      _
    $region11: #{fwd.1} parent=1 // pred_check_branch
      %27 = sbr.rel (0) target = $region13
    $region12: #{fwd.1} parent=1 // pred_region
      %s29 = ssub.s32 16, 16
      %30 = vsyncadd [#allocation5], %s29
      %s32 = sshll.u32 [#allocation4], 4
      %s33 = int_to_ptr.vmem [resolvable:$true] %s32
      %35 = dma.hbm_to_vmem [thread:$0]  %s2, 16, %s33, [#allocation5]
    $region13: #{fwd.1} parent=1 // pred_fallthru
      _
    // Predicated region
    $region14: #{fwd.1} parent=1 // pred_check
      _
    $region15: #{fwd.1} parent=1 // pred_check_branch
      %37 = sbr.rel (0) target = $region17
    $region16: #{fwd.1} parent=1 // pred_region
      _
    $region17: #{fwd.1} parent=1 // pred_fallthru
      _
    // Predicated region
    $region18: #{fwd.1} parent=1 // pred_check
      _
    $region19: #{fwd.1} parent=1 // pred_check_branch
      %39 = sbr.rel (0) target = $region21
    $region20: #{fwd.1} parent=1 // pred_region
      %s41 = ssub.s32 16, 16
      %42 = vsyncadd [#allocation5], %s41
      %s44 = sshll.u32 [#allocation6], 4
      %s45 = int_to_ptr.vmem [resolvable:$true] %s44
      %47 = dma.hbm_to_vmem [thread:$0]  %s4, 16, %s45, [#allocation5]
    $region21: #{fwd.1} parent=1 // pred_fallthru
      _
    // Predicated region
    $region22: #{fwd.1} parent=1 // pred_check
      _
    $region23: #{fwd.1} parent=1 // pred_check_branch
      %49 = sbr.rel (0) target = $region25
    $region24: #{fwd.1} parent=1 // pred_region
      %50 = dma.done [#allocation3], 1024
    $region25: #{fwd.1} parent=1 // pred_fallthru
      _
    // Predicated region
    $region26: #{fwd.1} parent=1 // pred_check
      _
    $region27: #{fwd.1} parent=1 // pred_check_branch
      %52 = sbr.rel (0) target = $region29
    $region28: #{fwd.1} parent=1 // pred_region
      %53 = dma.done [#allocation5], 16
    $region29: #{fwd.1} parent=1 // pred_fallthru
      _
    // Predicated region
    $region30: #{fwd.1} parent=1 // pred_check
      _
    $region31: #{fwd.1} parent=1 // pred_check_branch
      %55 = sbr.rel (0) target = $region33
    $region32: #{fwd.1} parent=1 // pred_region
      %56 = dma.done [#allocation5], 16
    $region33: #{fwd.1} parent=1 // pred_fallthru
      _
    %v58 = vld [vmem:[%s0] sm:$0xff]
    %v59 = vlaneseq
    %v60 = vand.u32 %v59, 127
    %vm61 = vcmp.lt.s32.totalorder %v60, 115
    %62 = vset.pattern.permute.xlu0 3
    %63 = vperm.xlu0 %62, %v58
    %v64 = vpop.permute.xlu0 %63
    %65 = vset.pattern.permute.xlu0 4
    %66 = vperm.xlu0 %65, %v58
    %v67 = vpop.permute.xlu0 %66
    %v68 = vsel %vm61, %v64, %v67
    %vm69 = vcmp.lt.s32.totalorder %v60, 65
    %70 = vset.pattern.permute.xlu0 2
    %71 = vperm.xlu0 %70, %v58
    %v72 = vpop.permute.xlu0 %71
    %v73 = vsel %vm69, %v72, %v68
    %vm74 = vcmp.lt.s32.totalorder %v60, 55
    %75 = vset.pattern.permute.xlu0 1
    %76 = vperm.xlu0 %75, %v58
    %v77 = vpop.permute.xlu0 %76
    %v78 = vsel %vm74, %v77, %v73
    %vm79 = vcmp.lt.s32.totalorder %v60, 50
    %80 = vset.pattern.permute.xlu0 0
    %81 = vperm.xlu0 %80, %v58
    %v82 = vpop.permute.xlu0 %81
    %v83 = vsel %vm79, %v82, %v78
    %vm84 = vcmp.eq.s32.totalorder %v60, %v83
    %v85 = vsel %vm84, 1, 0
    %v86 = vcvt.s32.f32 %v85
    %v87 = vpack.c.bf16 %v86, %v86
    %v88 = vld [vmem:[#allocation2] sm:$0xf]
    %v89 = vld [vmem:[#allocation2 + $0x4] sm:$0xf]
    %v90 = vld [vmem:[#allocation2 + $0x8] sm:$0xf]
    %v91 = vld [vmem:[#allocation2 + $0xc] sm:$0xf]
    %v92 = vld [vmem:[#allocation2 + $0x10] sm:$0xf]
    %v93 = vld [vmem:[#allocation2 + $0x14] sm:$0xf]
    %v94 = vld [vmem:[#allocation2 + $0x18] sm:$0xf]
    %v95 = vld [vmem:[#allocation2 + $0x1c] sm:$0xf]
    %v96 = vld [vmem:[#allocation2 + $0x20] sm:$0xf]
    %v97 = vld [vmem:[#allocation2 + $0x24] sm:$0xf]
    %v98 = vld [vmem:[#allocation2 + $0x28] sm:$0xf]
    %v99 = vld [vmem:[#allocation2 + $0x2c] sm:$0xf]
    %v100 = vld [vmem:[#allocation2 + $0x30] sm:$0xf]
    %v101 = vld [vmem:[#allocation2 + $0x34] sm:$0xf]
    %v102 = vld [vmem:[#allocation2 + $0x38] sm:$0xf]
    %v103 = vld [vmem:[#allocation2 + $0x3c] sm:$0xf]
    %v104 = vld [vmem:[#allocation4] sm:$0x1]
    %v106 = vlaneseq
    %v107 = vshrl.u32 %v106, 7
    %v108 = vsub.s32 0, %v107
    %v109 = vrot.slane %v104, %v108
    %v127 = vunpack.c.l.b16 %v88
    %v128 = vunpack.c.l.b16 %v89
    %v129 = vunpack.c.l.b16 %v90
    %v130 = vunpack.c.l.b16 %v91
    %v131 = vunpack.c.l.b16 %v92
    %v132 = vunpack.c.l.b16 %v93
    %v133 = vunpack.c.l.b16 %v94
    %v134 = vunpack.c.l.b16 %v95
    %v135 = vunpack.c.l.b16 %v96
    %v136 = vunpack.c.l.b16 %v97
    %v137 = vunpack.c.l.b16 %v98
    %v138 = vunpack.c.l.b16 %v99
    %v139 = vunpack.c.l.b16 %v100
    %v140 = vunpack.c.l.b16 %v101
    %v141 = vunpack.c.l.b16 %v102
    %v142 = vunpack.c.l.b16 %v103
    %v143 = vpack.c.b16 %v128, %v127
    %v144 = vpack.c.b16 %v130, %v129
    %v145 = vpack.c.b16 %v132, %v131
    %v146 = vpack.c.b16 %v134, %v133
    %v147 = vpack.c.b16 %v136, %v135
    %v148 = vpack.c.b16 %v138, %v137
    %v149 = vpack.c.b16 %v140, %v139
    %v150 = vpack.c.b16 %v142, %v141
    %159 = vmatprep.subr.bf16.mxu0 0
    %160 = vmatpush1.bf16.msra.mxu0 %v143
    %161 = vmatprep.subr.bf16.mxu0 0
    %162 = vmatpush1.bf16.msra.mxu0 %v144
    %163 = vmatprep.subr.bf16.mxu0 0
    %164 = vmatpush1.bf16.msra.mxu0 %v145
    %165 = vmatprep.subr.bf16.mxu0 0
    %166 = vmatpush1.bf16.msra.mxu0 %v146
    %167 = vmatprep.subr.bf16.mxu0 0
    %168 = vmatpush1.bf16.msra.mxu0 %v147
    %169 = vmatprep.subr.bf16.mxu0 0
    %170 = vmatpush1.bf16.msra.mxu0 %v148
    %171 = vmatprep.subr.bf16.mxu0 0
    %172 = vmatpush1.bf16.msra.mxu0 %v149
    %173 = vmatprep.subr.bf16.mxu0 0
    %174 = vmatpush1.bf16.msra.mxu0 %v150
    %175 = vmatprep.subr.bf16.mxu0 0
    %176 = vmatpush1.bf16.msra.mxu0 0
    %177 = vmatprep.subr.bf16.mxu0 0
    %178 = vmatpush1.bf16.msra.mxu0 0
    %179 = vmatprep.subr.bf16.mxu0 0
    %180 = vmatpush1.bf16.msra.mxu0 0
    %181 = vmatprep.subr.bf16.mxu0 0
    %182 = vmatpush1.bf16.msra.mxu0 0
    %183 = vmatprep.subr.bf16.mxu0 0
    %184 = vmatpush1.bf16.msra.mxu0 0
    %185 = vmatprep.subr.bf16.mxu0 0
    %186 = vmatpush1.bf16.msra.mxu0 0
    %187 = vmatprep.subr.bf16.mxu0 0
    %188 = vmatpush1.bf16.msra.mxu0 0
    %189 = vmatprep.subr.bf16.mxu0 0
    %190 = vmatpush1.bf16.msra.mxu0 0
    %191 = vmatprep.mubr.bf16.mxu0 0
    %192 = vmatmul.mubr.bf16.gmra.mrb[0].mxu0 %v87
    %v193 = vpop.f32.mrb[0].mxu0
    %v194 = vadd.f32 %v109, %v193
    %v195 = vpop.f32.mrb[0].mxu0
    %v196 = vpop.f32.mrb[0].mxu0
    %v197 = vpop.f32.mrb[0].mxu0
    %198 = vdwg.mxu0
    %v199 = vmax.f32 %v194, 0.0
    %v200 = vpack.c.bf16 %v199, %v199
    %v201 = vld [vmem:[%s3] sm:$0xf]
    %v202 = vld [vmem:[%s3 + $0x4] sm:$0xf]
    %v203 = vld [vmem:[%s3 + $0x8] sm:$0xf]
    %v204 = vld [vmem:[%s3 + $0xc] sm:$0xf]
    %v205 = vld [vmem:[%s3 + $0x10] sm:$0xf]
    %v206 = vld [vmem:[%s3 + $0x14] sm:$0xf]
    %v207 = vld [vmem:[%s3 + $0x18] sm:$0xf]
    %v208 = vld [vmem:[%s3 + $0x1c] sm:$0xf]
    %v209 = vld [vmem:[%s3 + $0x20] sm:$0xf]
    %v210 = vld [vmem:[%s3 + $0x24] sm:$0xf]
    %v211 = vld [vmem:[%s3 + $0x28] sm:$0xf]
    %v212 = vld [vmem:[%s3 + $0x2c] sm:$0xf]
    %v213 = vld [vmem:[%s3 + $0x30] sm:$0xf]
    %v214 = vld [vmem:[%s3 + $0x34] sm:$0xf]
    %v215 = vld [vmem:[%s3 + $0x38] sm:$0xf]
    %v216 = vld [vmem:[%s3 + $0x3c] sm:$0xf]
    %v217 = vld [vmem:[#allocation6] sm:$0x1]
    %v219 = vlaneseq
    %v220 = vshrl.u32 %v219, 7
    %v221 = vsub.s32 0, %v220
    %v222 = vrot.slane %v217, %v221
    %v240 = vunpack.c.l.b16 %v201
    %v241 = vunpack.c.l.b16 %v202
    %v242 = vunpack.c.l.b16 %v203
    %v243 = vunpack.c.l.b16 %v204
    %v244 = vunpack.c.l.b16 %v205
    %v245 = vunpack.c.l.b16 %v206
    %v246 = vunpack.c.l.b16 %v207
    %v247 = vunpack.c.l.b16 %v208
    %v248 = vunpack.c.l.b16 %v209
    %v249 = vunpack.c.l.b16 %v210
    %v250 = vunpack.c.l.b16 %v211
    %v251 = vunpack.c.l.b16 %v212
    %v252 = vunpack.c.l.b16 %v213
    %v253 = vunpack.c.l.b16 %v214
    %v254 = vunpack.c.l.b16 %v215
    %v255 = vunpack.c.l.b16 %v216
    %v256 = vpack.c.b16 %v241, %v240
    %v257 = vpack.c.b16 %v243, %v242
    %v258 = vpack.c.b16 %v245, %v244
    %v259 = vpack.c.b16 %v247, %v246
    %v260 = vpack.c.b16 %v249, %v248
    %v261 = vpack.c.b16 %v251, %v250
    %v262 = vpack.c.b16 %v253, %v252
    %v263 = vpack.c.b16 %v255, %v254
    %272 = vmatprep.subr.bf16.mxu0 0
    %273 = vmatpush1.bf16.msra.mxu0 %v256
    %274 = vmatprep.subr.bf16.mxu0 0
    %275 = vmatpush1.bf16.msra.mxu0 %v257
    %276 = vmatprep.subr.bf16.mxu0 0
    %277 = vmatpush1.bf16.msra.mxu0 %v258
    %278 = vmatprep.subr.bf16.mxu0 0
    %279 = vmatpush1.bf16.msra.mxu0 %v259
    %280 = vmatprep.subr.bf16.mxu0 0
    %281 = vmatpush1.bf16.msra.mxu0 %v260
    %282 = vmatprep.subr.bf16.mxu0 0
    %283 = vmatpush1.bf16.msra.mxu0 %v261
    %284 = vmatprep.subr.bf16.mxu0 0
    %285 = vmatpush1.bf16.msra.mxu0 %v262
    %286 = vmatprep.subr.bf16.mxu0 0
    %287 = vmatpush1.bf16.msra.mxu0 %v263
    %288 = vmatprep.subr.bf16.mxu0 0
    %289 = vmatpush1.bf16.msra.mxu0 0
    %290 = vmatprep.subr.bf16.mxu0 0
    %291 = vmatpush1.bf16.msra.mxu0 0
    %292 = vmatprep.subr.bf16.mxu0 0
    %293 = vmatpush1.bf16.msra.mxu0 0
    %294 = vmatprep.subr.bf16.mxu0 0
    %295 = vmatpush1.bf16.msra.mxu0 0
    %296 = vmatprep.subr.bf16.mxu0 0
    %297 = vmatpush1.bf16.msra.mxu0 0
    %298 = vmatprep.subr.bf16.mxu0 0
    %299 = vmatpush1.bf16.msra.mxu0 0
    %300 = vmatprep.subr.bf16.mxu0 0
    %301 = vmatpush1.bf16.msra.mxu0 0
    %302 = vmatprep.subr.bf16.mxu0 0
    %303 = vmatpush1.bf16.msra.mxu0 0
    %304 = vmatprep.mubr.bf16.mxu0 0
    %305 = vmatmul.mubr.bf16.gmra.mrb[0].mxu0 %v200
    %v306 = vpop.f32.mrb[0].mxu0
    %v307 = vadd.f32 %v222, %v306
    %v308 = vpop.f32.mrb[0].mxu0
    %v309 = vpop.f32.mrb[0].mxu0
    %v310 = vpop.f32.mrb[0].mxu0
    %311 = vdwg.mxu0
    %312 = vst [vmem:[%s5] sm:$0xff] %v307
    // Predicated region
    $region34: #{fwd.1} parent=1 // pred_check
      _
    $region35: #{fwd.1} parent=1 // pred_check_branch
      %314 = sbr.rel (0) target = $region37
    $region36: #{fwd.1} parent=1 // pred_region
      _
    $region37: #{fwd.1} parent=1 // pred_fallthru
      _
    // Predicated region
    $region38: #{fwd.1} parent=1 // pred_check
      _
    $region39: #{fwd.1} parent=1 // pred_check_branch
      %316 = sbr.rel (0) target = $region41
    $region40: #{fwd.1} parent=1 // pred_region
      _
    $region41: #{fwd.1} parent=1 // pred_fallthru
      _
    %317 = vsyncpa [#allocation3], 1
    %318 = vsyncpa [#allocation5], 1

</llo_original>
